<compile_context>
chip_gen: v7x
topology: tpu7x:2x2x1
jax: 0.10.0
libtpu: 0.0.40
codegen_flags: <defaults>
</compile_context>

<pallas_src>
import jax
import jax.numpy as jnp
from jax.experimental import pallas as pl
from jax.experimental.pallas import tpu as pltpu


# ----------------------------- Pallas kernel ------------------------------ #
def _se_kernel(x_ref, w_ref, b_ref, o_ref):
    # x_ref: (C, HW) one sample; channels on sublanes, flattened spatial on lanes
    # w_ref: (C, C)  1x1-conv weight, rows = out_channel, cols = in_channel
    # b_ref: (C, 1)  1x1-conv bias as a column
    # o_ref: (C, HW)
    xs = x_ref[...].astype(jnp.float32)
    hw = xs.shape[1]

    # Squeeze: global average pool over the spatial (lane) axis -> (C, 1)
    mean = jnp.sum(xs, axis=1, keepdims=True) * (1.0 / hw)

    # Excitation: 1x1 conv == per-sample FC (tiny MXU matmul) + bias, sigmoid in f32
    y = jnp.dot(w_ref[...], mean, preferred_element_type=jnp.float32) + b_ref[...]
    s = jax.nn.sigmoid(y)                                   # (C, 1) gate per channel

    # Scale: broadcast the per-channel gate across all lanes; lane-dense store
    o_ref[...] = (xs * s).astype(o_ref.dtype)


# ------------------------------- wrapper ----------------------------------- #
def squeeze_excitation(x_nchw, fc_weight_oihw, fc_bias):
    """Pallas SE-block forward. x: (N, C, H, W) -> (N, C, H, W)."""
    n, c, h, w = x_nchw.shape
    oc, ic, kh, kw = fc_weight_oihw.shape
    assert (oc, ic, kh, kw) == (c, c, 1, 1), "fc must be a 1x1 conv C->C"
    hw = h * w

    # Free, contiguous reshapes only — no extra HBM copies.
    x_flat = x_nchw.reshape(n, c, hw)
    w_mat = fc_weight_oihw.reshape(c, c).astype(jnp.float32)
    b_col = fc_bias.reshape(c, 1).astype(jnp.float32)

    out_flat = pl.pallas_call(
        _se_kernel,
        out_shape=jax.ShapeDtypeStruct((n, c, hw), x_nchw.dtype),
        grid_spec=pltpu.PrefetchScalarGridSpec(
            num_scalar_prefetch=0,
            grid=(n,),                                           # one step per sample
            in_specs=[
                pl.BlockSpec((None, c, hw), lambda i: (i, 0, 0)),  # x slab (squeezed N)
                pl.BlockSpec((c, c), lambda i: (0, 0)),            # weight (resident)
                pl.BlockSpec((c, 1), lambda i: (0, 0)),            # bias   (resident)
            ],
            out_specs=pl.BlockSpec((None, c, hw), lambda i: (i, 0, 0)),
        ),
        compiler_params=pltpu.CompilerParams(
            dimension_semantics=("parallel",)),
    )(x_flat, w_mat, b_col)

    # TODO(synk): for very large H*W (per-sample slab exceeding VMEM) switch to a
    # two-pass grid (spatially-tiled pooled-mean reduction, then a tiled rescale).
    return out_flat.reshape(n, c, h, w)


# --------------------------- reference (pure JAX) -------------------------- #
def _reference(x, w, b):
    _, c, _, _ = x.shape
    avg = jnp.mean(x, axis=(2, 3))                               # (N, C)
    y = jnp.einsum("ni,oi->no", avg, w.reshape(c, c)) + b[None, :]
    s = jax.nn.sigmoid(y)[:, :, None, None]
    return x * s


if __name__ == "__main__":
    # Module config: SqueezeExacitationBlock(in_channels=4) on a (2, 4, 16, 16) input.
    N, C, H, W = 2, 4, 16, 16

    key = jax.random.PRNGKey(0)
    kx, kw, kb = jax.random.split(key, 3)
    x = jax.random.normal(kx, (N, C, H, W), dtype=jnp.float32)
    # Deterministic synthetic parameters (shapes per nn.Conv2d(C, C, 1)).
    fc_weight = jax.random.normal(kw, (C, C, 1, 1), dtype=jnp.float32) * 0.3
    fc_bias = 0.1 * jax.random.normal(kb, (C,), dtype=jnp.float32)

    fn = jax.jit(squeeze_excitation)
    out = jax.block_until_ready(fn(x, fc_weight, fc_bias))

    ref = _reference(x, fc_weight, fc_bias)
    assert out.shape == (N, C, H, W), out.shape
    assert jnp.allclose(out, ref, atol=1e-5, rtol=1e-4), \
        float(jnp.max(jnp.abs(out - ref)))

    print("KERNEL_OK")
</pallas_src>

<mosaic_0001>
module attributes {stable_mosaic.version = 11 : i64} {
  func.func @_se_kernel(%arg0: i32, %arg1: memref<1x4x256xf32, #tpu.memory_space<vmem>>, %arg2: memref<4x4xf32, #tpu.memory_space<vmem>>, %arg3: memref<4x1xf32, #tpu.memory_space<vmem>>, %arg4: memref<1x4x256xf32, #tpu.memory_space<vmem>>) attributes {dimension_semantics = [#tpu.dimension_semantics<parallel>], iteration_bounds = array<i64: 2>, scalar_prefetch = 0 : i64, scratch_operands = 0 : i64, tpu.core_type = #tpu.core_type<tc>, window_params = [{transform_indices = @transform_0, window_bounds = array<i64: 1, 4, 256>}, {pipeline_mode = #tpu.pipeline_mode<synchronous>, transform_indices = @transform_1, window_bounds = array<i64: 4, 4>}, {pipeline_mode = #tpu.pipeline_mode<synchronous>, transform_indices = @transform_2, window_bounds = array<i64: 4, 1>}, {transform_indices = @transform_3, window_bounds = array<i64: 1, 4, 256>}]} {
    %c0 = arith.constant 0 : index
    %c0_0 = arith.constant 0 : index
    %c0_1 = arith.constant 0 : index
    %0 = vector.load %arg1[%c0, %c0_0, %c0_1] : memref<1x4x256xf32, #tpu.memory_space<vmem>>, vector<1x4x256xf32>
    %1 = vector.shape_cast %0 : vector<1x4x256xf32> to vector<4x256xf32>
    %cst = arith.constant dense<0.000000e+00> : vector<4xf32>
    %2 = vector.multi_reduction <add>, %1, %cst [1] : vector<4x256xf32> to vector<4xf32>
    %3 = vector.shape_cast %2 : vector<4xf32> to vector<4x1xf32>
    %cst_2 = arith.constant 3.906250e-03 : f32
    %4 = vector.broadcast %cst_2 : f32 to vector<4x1xf32>
    %5 = arith.mulf %3, %4 : vector<4x1xf32>
    %c0_3 = arith.constant 0 : index
    %c0_4 = arith.constant 0 : index
    %6 = vector.load %arg2[%c0_3, %c0_4] : memref<4x4xf32, #tpu.memory_space<vmem>>, vector<4x4xf32>
    %cst_5 = arith.constant dense<0.000000e+00> : vector<4x1xf32>
    %7 = tpu.matmul %6, %5, %cst_5 {dimension_numbers = #tpu.dot_dimension_numbers<[1], [0], [0], [1], [0, 0, 1, 1], [], []>} : vector<4x4xf32>, vector<4x1xf32>, vector<4x1xf32> -> vector<4x1xf32>
    %c0_6 = arith.constant 0 : index
    %c0_7 = arith.constant 0 : index
    %8 = vector.load %arg3[%c0_6, %c0_7] : memref<4x1xf32, #tpu.memory_space<vmem>>, vector<4x1xf32>
    %9 = arith.addf %7, %8 : vector<4x1xf32>
    %10 = arith.negf %9 : vector<4x1xf32>
    %11 = math.exp %10 : vector<4x1xf32>
    %cst_8 = arith.constant 1.000000e+00 : f32
    %12 = vector.broadcast %cst_8 : f32 to vector<4x1xf32>
    %13 = arith.addf %12, %11 : vector<4x1xf32>
    %14 = arith.divf %12, %13 : vector<4x1xf32>
    %15 = vector.broadcast %14 : vector<4x1xf32> to vector<4x256xf32>
    %16 = arith.mulf %1, %15 : vector<4x256xf32>
    %c0_9 = arith.constant 0 : index
    %c0_10 = arith.constant 0 : index
    %c0_11 = arith.constant 0 : index
    %17 = vector.load %arg4[%c0_9, %c0_10, %c0_11] : memref<1x4x256xf32, #tpu.memory_space<vmem>>, vector<1x4x256xf32>
    %18 = vector.shape_cast %17 : vector<1x4x256xf32> to vector<4x256xf32>
    %19 = vector.shape_cast %16 : vector<4x256xf32> to vector<1x4x256xf32>
    tpu.vector_store %arg4[%c0_9, %c0_10, %c0_11], %19 {strides = array<i32>} : memref<1x4x256xf32, #tpu.memory_space<vmem>>, vector<1x4x256xf32>,
    return
  }
  func.func @transform_0(%arg0: i32) -> (i32, i32, i32) {
    %c0_i32 = arith.constant 0 : i32
    %c0_i32_0 = arith.constant 0 : i32
    %c0_i32_1 = arith.constant 0 : i32
    return %arg0, %c0_i32, %c0_i32_0 : i32, i32, i32
  }
  func.func @transform_1(%arg0: i32) -> (i32, i32) {
    %c0_i32 = arith.constant 0 : i32
    %c0_i32_0 = arith.constant 0 : i32
    %c0_i32_1 = arith.constant 0 : i32
    return %c0_i32, %c0_i32_0 : i32, i32
  }
  func.func @transform_2(%arg0: i32) -> (i32, i32) {
    %c0_i32 = arith.constant 0 : i32
    %c0_i32_0 = arith.constant 0 : i32
    %c0_i32_1 = arith.constant 0 : i32
    return %c0_i32, %c0_i32_0 : i32, i32
  }
  func.func @transform_3(%arg0: i32) -> (i32, i32, i32) {
    %c0_i32 = arith.constant 0 : i32
    %c0_i32_0 = arith.constant 0 : i32
    %c0_i32_1 = arith.constant 0 : i32
    return %arg0, %c0_i32, %c0_i32_0 : i32, i32, i32
  }
}

</mosaic_0001>

<llo_original>
// kernel: squeeze_excitation.1
$region0: #{squeeze_excitation.1}
  #allocation0 [shape = 'u32[]', space=smem, size = 0x4, offset = 0x4, fixed_abs, tag = 'smem constant byte address 0x4 - core index']
  #allocation1 [shape = 'u32[144,128]{1,0:T(1,128)}', space=vmem, size = 0x12000, scoped, tag = 'internal scratch']
  %s0 = inlined_call_operand.vmem [shape: f32[2,4,256], index: 0, kind: input, shape index: {}]
  %s1 = inlined_call_operand.vmem [shape: f32[4,4], index: 1, kind: input, shape index: {}]
  %s2 = inlined_call_operand.vmem [shape: f32[4,1], index: 2, kind: input, shape index: {}]
  %s3 = inlined_call_operand.vmem [shape: f32[2,4,256], index: 3, kind: output, shape index: {}]
  %s4 = sld [smem:[#allocation0]]
  $region45: #{squeeze_excitation.1} parent=0
    _
  %s6 = ssub.s32 1, %s4
  %s7 = scalar_select 0, %s6, %s4
  loop: start=0, step=1, limit=4
  $region2: #{squeeze_excitation.1} parent=0 // loop_pre_header
    _
  $region3: #{squeeze_excitation.1} parent=0 // loop_header
    %s9 = sphi 0, %s13
    %p10 = scmp.ge.s32.totalorder %s9, 4
    %s19 = sphi 0, %s21
    %s22 = sphi 0, %s19
    %s23 = sphi 0, %s22
    %s39 = sphi 0, %s23
    %s43 = sphi 0, %s43
    %s45 = sphi 0, %s43
    %s46 = sphi 0, %s45
    %s60 = sphi 0, %s46
    %s64 = sphi 0, %s64
    %s66 = sphi 0, %s64
    %s67 = sphi 0, %s66
    %s81 = sphi 0, %s67
    %s87 = sphi 0, %s89
    %s90 = sphi 0, %s87
    %s91 = sphi 0, %s90
    %s107 = sphi 0, %s91
  $region4: #{squeeze_excitation.1} parent=0 // loop_header_branch
    %12 = sbr.rel (%p10) target = $region8
  $region5: #{squeeze_excitation.1} parent=0 // loop_body
    %s14 = ssub.s32 %s9, 1
    %s15 = ssub.s32 %s9, 2
    %s16 = sadd.s32 %s9, 1
    %s17 = ssub.s32 %s9, %s16
    %p18 = scmp.eq.s32.totalorder %s17, 0
    %s20 = sadd.s32 %s19, 1
    %s21 = scalar_select %p18, %s19, %s20
    %p24 = pneg %p18
    %p25 = scmp.eq.s32.totalorder %s9, 1
    %p26 = por %p24, %p25
    %p27 = scmp.ne.s32.totalorder %s19, %s22
    %p28 = scmp.eq.s32.totalorder %s9, 0
    %p29 = por %p27, %p28
    %p30 = scmp.ne.s32.totalorder %s19, %s22
    %p31 = scmp.eq.s32.totalorder %s14, 1
    %p32 = por %p30, %p31
    %p33 = scmp.ne.s32.totalorder %s22, %s23
    %p34 = scmp.eq.s32.totalorder %s14, 0
    %p35 = por %p33, %p34
    %p36 = scmp.ne.s32.totalorder %s22, %s23
    %p37 = scmp.eq.s32.totalorder %s15, 1
    %p38 = por %p36, %p37
    %p40 = scmp.ne.s32.totalorder %s23, %s39
    %p41 = scmp.eq.s32.totalorder %s15, 0
    %p42 = por %p40, %p41
    %s44 = sadd.s32 %s43, 1
    %p47 = scmp.eq.s32.totalorder %s9, 1
    %p48 = scmp.ne.s32.totalorder %s43, %s45
    %p49 = scmp.eq.s32.totalorder %s9, 0
    %p50 = por %p48, %p49
    %p51 = scmp.ne.s32.totalorder %s43, %s45
    %p52 = scmp.eq.s32.totalorder %s14, 1
    %p53 = por %p51, %p52
    %p54 = scmp.ne.s32.totalorder %s45, %s46
    %p55 = scmp.eq.s32.totalorder %s14, 0
    %p56 = por %p54, %p55
    %p57 = scmp.ne.s32.totalorder %s45, %s46
    %p58 = scmp.eq.s32.totalorder %s15, 1
    %p59 = por %p57, %p58
    %p61 = scmp.ne.s32.totalorder %s46, %s60
    %p62 = scmp.eq.s32.totalorder %s15, 0
    %p63 = por %p61, %p62
    %s65 = sadd.s32 %s64, 1
    %p68 = scmp.eq.s32.totalorder %s9, 1
    %p69 = scmp.ne.s32.totalorder %s64, %s66
    %p70 = scmp.eq.s32.totalorder %s9, 0
    %p71 = por %p69, %p70
    %p72 = scmp.ne.s32.totalorder %s64, %s66
    %p73 = scmp.eq.s32.totalorder %s14, 1
    %p74 = por %p72, %p73
    %p75 = scmp.ne.s32.totalorder %s66, %s67
    %p76 = scmp.eq.s32.totalorder %s14, 0
    %p77 = por %p75, %p76
    %p78 = scmp.ne.s32.totalorder %s66, %s67
    %p79 = scmp.eq.s32.totalorder %s15, 1
    %p80 = por %p78, %p79
    %p82 = scmp.ne.s32.totalorder %s67, %s81
    %p83 = scmp.eq.s32.totalorder %s15, 0
    %p84 = por %p82, %p83
    %s85 = ssub.s32 %s9, %s16
    %p86 = scmp.eq.s32.totalorder %s85, 0
    %s88 = sadd.s32 %s87, 1
    %s89 = scalar_select %p86, %s87, %s88
    %p92 = pneg %p86
    %p93 = scmp.eq.s32.totalorder %s9, 1
    %p94 = por %p92, %p93
    %p95 = scmp.ne.s32.totalorder %s87, %s90
    %p96 = scmp.eq.s32.totalorder %s9, 0
    %p97 = por %p95, %p96
    %p98 = scmp.ne.s32.totalorder %s87, %s90
    %p99 = scmp.eq.s32.totalorder %s14, 1
    %p100 = por %p98, %p99
    %p101 = scmp.ne.s32.totalorder %s90, %s91
    %p102 = scmp.eq.s32.totalorder %s14, 0
    %p103 = por %p101, %p102
    %p104 = scmp.ne.s32.totalorder %s90, %s91
    %p105 = scmp.eq.s32.totalorder %s15, 1
    %p106 = por %p104, %p105
    %p108 = scmp.ne.s32.totalorder %s91, %s107
    %p109 = scmp.eq.s32.totalorder %s15, 0
    %p110 = por %p108, %p109
    %p111 = scmp.le.s32.totalorder 1, %s9
    %p112 = scmp.lt.s32.totalorder %s9, 3
    %p113 = pnand %p111, %p112
    %p114 = pneg %p113
    // Predicated region
    $region9: #{squeeze_excitation.1} parent=5 // pred_check
      _
    $region10: #{squeeze_excitation.1} parent=5 // pred_check_branch
      %116 = sbr.rel (%p113) target = $region12
    $region11: #{squeeze_excitation.1} parent=5 // pred_region
      %s117 = ssub.s32 %s9, 1
      // Predicated region
      $region13: #{squeeze_excitation.1} parent=11 // pred_check
        %p118 = pneg %p56
      $region14: #{squeeze_excitation.1} parent=11 // pred_check_branch
        %120 = sbr.rel (%p118) target = $region16
      $region15: #{squeeze_excitation.1} parent=11 // pred_region
        _
      $region16: #{squeeze_excitation.1} parent=11 // pred_fallthru
        _
      // Predicated region
      $region17: #{squeeze_excitation.1} parent=11 // pred_check
        %p121 = pneg %p77
      $region18: #{squeeze_excitation.1} parent=11 // pred_check_branch
        %123 = sbr.rel (%p121) target = $region20
      $region19: #{squeeze_excitation.1} parent=11 // pred_region
        _
      $region20: #{squeeze_excitation.1} parent=11 // pred_fallthru
        _
    $region12: #{squeeze_excitation.1} parent=5 // pred_fallthru
      _
    %p124 = scmp.lt.s32.totalorder %s9, 2
    // Predicated region
    $region21: #{squeeze_excitation.1} parent=5 // pred_check
      %p125 = pneg %p124
    $region22: #{squeeze_excitation.1} parent=5 // pred_check_branch
      %127 = sbr.rel (%p125) target = $region24
    $region23: #{squeeze_excitation.1} parent=5 // pred_region
      // Predicated region
      $region25: #{squeeze_excitation.1} parent=23 // pred_check
        %p128 = pneg %p29
      $region26: #{squeeze_excitation.1} parent=23 // pred_check_branch
        %130 = sbr.rel (%p128) target = $region28
      $region27: #{squeeze_excitation.1} parent=23 // pred_region
        %p131 = scmp.lt.s32.totalorder %s9, 1
        %s132 = scalar_select %p131, %s9, 1
        %s133 = smul.addr %s132, 2
        %s134 = smul.addr %s133, 4
        %s135 = scalar_lea.vmem %s0, %s134
      $region28: #{squeeze_excitation.1} parent=23 // pred_fallthru
        _
    $region24: #{squeeze_excitation.1} parent=5 // pred_fallthru
      _
    %p136 = scmp.le.s32.totalorder 1, %s9
    %p137 = scmp.lt.s32.totalorder %s9, 3
    %p138 = pnand %p136, %p137
    %p139 = pneg %p138
    // Predicated region
    $region29: #{squeeze_excitation.1} parent=5 // pred_check
      _
    $region30: #{squeeze_excitation.1} parent=5 // pred_check_branch
      %141 = sbr.rel (%p138) target = $region32
    $region31: #{squeeze_excitation.1} parent=5 // pred_region
      %s142 = ssub.s32 %s9, 1
      %p143 = scmp.lt.s32.totalorder %s14, 1
      %s144 = scalar_select %p143, %s14, 1
      %s145 = smul.addr %s144, 2
      %s146 = smul.addr %s145, 4
      %s147 = scalar_lea.vmem %s0, %s146
      %p148 = pneg %p35
      %p149 = pneg %p32
      %p150 = pneg %p56
      %p151 = pneg %p53
      %p152 = pneg %p77
      %p153 = pneg %p74
      %p154 = pneg %p103
      %p155 = pneg %p100
      %p156 = scmp.lt.s32.totalorder %s14, 1
      %s157 = scalar_select %p156, %s14, 1
      %s158 = smul.addr %s157, 2
      %s159 = smul.addr %s158, 4
      %s160 = scalar_lea.vmem %s3, %s159
      %p161 = scmp.lt.s32.totalorder %s14, 1
      %s162 = scalar_select %p161, %s14, 1
      %s163 = smul.addr %s162, 2
      %s164 = smul.addr %s163, 4
      %s165 = scalar_lea.vmem %s0, %s164
      %p166 = scmp.lt.s32.totalorder %s14, 1
      %s167 = scalar_select %p166, %s14, 1
      %s168 = smul.addr %s167, 2
      %s169 = smul.addr %s168, 4
      %s170 = scalar_lea.vmem %s3, %s169
      %v171 = vld [vmem:[%s165] sm:$0xff]
      %v173 = vcombine.high %v171, %v171
      %vm175 = vcmask 1043456
      %v176 = vsel %vm175, %v171, 0.0
      %v177 = vsel %vm175, %v173, 0.0
      %v178 = vadd.f32 %v176, %v177
      %179 = vadd.xlane.f32.xlu0 %v178
      %v180 = vpop.xlane.xlu0 %179
      %v181 = vmul.f32 %v180, 0.00390625
      %v182 = vld [vmem:[%s1] sm:$0xf]
      %v183 = vld [vmem:[%s2] sm:$0xf]
      %vm184 = vcmask 31744
      %v186 = vsel %vm184, %v182, 0
      %v189 = vsel %vm175, %v181, 0
      %191 = vmatprep.subr.mxu0 0.0
      %192 = vmatpush1.msra.mxu0 %v189
      %193 = vmatprep.subr.mxu0 0.0
      %194 = vmatpush1.msra.mxu0 0.0
      %195 = vmatprep.subr.mxu0 0.0
      %196 = vmatpush1.msra.mxu0 0.0
      %197 = vmatprep.subr.mxu0 0.0
      %198 = vmatpush1.msra.mxu0 0.0
      %199 = vmatprep.subr.mxu0 0.0
      %200 = vmatpush1.msra.mxu0 0.0
      %201 = vmatprep.subr.mxu0 0.0
      %202 = vmatpush1.msra.mxu0 0.0
      %203 = vmatprep.subr.mxu0 0.0
      %204 = vmatpush1.msra.mxu0 0.0
      %205 = vmatprep.subr.mxu0 0.0
      %206 = vmatpush1.msra.mxu0 0.0
      %207 = vmatprep.subr.mxu0 0.0
      %208 = vmatpush1.msra.mxu0 0.0
      %209 = vmatprep.subr.mxu0 0.0
      %210 = vmatpush1.msra.mxu0 0.0
      %211 = vmatprep.subr.mxu0 0.0
      %212 = vmatpush1.msra.mxu0 0.0
      %213 = vmatprep.subr.mxu0 0.0
      %214 = vmatpush1.msra.mxu0 0.0
      %215 = vmatprep.subr.mxu0 0.0
      %216 = vmatpush1.msra.mxu0 0.0
      %217 = vmatprep.subr.mxu0 0.0
      %218 = vmatpush1.msra.mxu0 0.0
      %219 = vmatprep.subr.mxu0 0.0
      %220 = vmatpush1.msra.mxu0 0.0
      %221 = vmatprep.subr.mxu0 0.0
      %222 = vmatpush1.msra.mxu0 0.0
      %223 = vmatprep.subr.mxu0 0.0
      %224 = vmatpush1.msra.mxu0 0.0
      %225 = vmatprep.subr.mxu0 0.0
      %226 = vmatpush1.msra.mxu0 0.0
      %227 = vmatprep.subr.mxu0 0.0
      %228 = vmatpush1.msra.mxu0 0.0
      %229 = vmatprep.subr.mxu0 0.0
      %230 = vmatpush1.msra.mxu0 0.0
      %231 = vmatprep.subr.mxu0 0.0
      %232 = vmatpush1.msra.mxu0 0.0
      %233 = vmatprep.subr.mxu0 0.0
      %234 = vmatpush1.msra.mxu0 0.0
      %235 = vmatprep.subr.mxu0 0.0
      %236 = vmatpush1.msra.mxu0 0.0
      %237 = vmatprep.subr.mxu0 0.0
      %238 = vmatpush1.msra.mxu0 0.0
      %239 = vmatprep.subr.mxu0 0.0
      %240 = vmatpush1.msra.mxu0 0.0
      %241 = vmatprep.subr.mxu0 0.0
      %242 = vmatpush1.msra.mxu0 0.0
      %243 = vmatprep.subr.mxu0 0.0
      %244 = vmatpush1.msra.mxu0 0.0
      %245 = vmatprep.subr.mxu0 0.0
      %246 = vmatpush1.msra.mxu0 0.0
      %247 = vmatprep.subr.mxu0 0.0
      %248 = vmatpush1.msra.mxu0 0.0
      %249 = vmatprep.subr.mxu0 0.0
      %250 = vmatpush1.msra.mxu0 0.0
      %251 = vmatprep.subr.mxu0 0.0
      %252 = vmatpush1.msra.mxu0 0.0
      %253 = vmatprep.subr.mxu0 0.0
      %254 = vmatpush1.msra.mxu0 0.0
      %255 = vmatprep.mubr.f32.mxu0 0.0
      %256 = vmatmul.mubr.f32.gmra.mrb[0].mxu0 %v186
      %v257 = vpop.f32.mrb[0].mxu0
      %v258 = vadd.f32 %v183, %v257
      %v259 = vpop.f32.mrb[0].mxu0
      %260 = vdwg.mxu0
      %v261 = vxor.u32 %v258, 2147483648
      %v262 = vmul.f32 %v261, 1.442695
      %v263 = vpow.pop %v262
      %v264 = vadd.f32 %v263, 1.0
      %v265 = vrcp.pop %v264
      %v266 = vmul.f32 1.0, %v265
      %268 = vset.pattern.permute.xlu0 0
      %269 = vperm.xlu0 %268, %v266
      %v270 = vpop.permute.xlu0 %269
      %v272 = vunpack.c.l.s4 839922192
      %v273 = vunpack.c.0.s8 %v272
      %v274 = vlaneseq
      %v275 = vshrl.u32 %v274, 7
      %v276 = vsub.s32 %v273, %v275
      %v277 = vrot.slane %v270, %v276
      %v279 = vmul.f32 %v171, %v277
      %280 = vst [vmem:[%s170] sm:$0xff] %v279
      %p281 = scmp.lt.s32.totalorder %s14, 1
      %s282 = scalar_select %p281, %s14, 1
      %s283 = smul.addr %s282, 2
      %s284 = smul.addr %s283, 4
      %s285 = scalar_lea.vmem %s3, %s284
      // Predicated region
      $region33: #{squeeze_excitation.1} parent=31 // pred_check
        %p286 = pneg %p100
      $region34: #{squeeze_excitation.1} parent=31 // pred_check_branch
        %288 = sbr.rel (%p286) target = $region36
      $region35: #{squeeze_excitation.1} parent=31 // pred_region
        _
      $region36: #{squeeze_excitation.1} parent=31 // pred_fallthru
        _
    $region32: #{squeeze_excitation.1} parent=5 // pred_fallthru
      _
    %p289 = scmp.le.s32.totalorder 2, %s9
    // Predicated region
    $region37: #{squeeze_excitation.1} parent=5 // pred_check
      %p290 = pneg %p289
    $region38: #{squeeze_excitation.1} parent=5 // pred_check_branch
      %292 = sbr.rel (%p290) target = $region40
    $region39: #{squeeze_excitation.1} parent=5 // pred_region
      %s293 = ssub.s32 %s9, 2
      // Predicated region
      $region41: #{squeeze_excitation.1} parent=39 // pred_check
        %p294 = pneg %p106
      $region42: #{squeeze_excitation.1} parent=39 // pred_check_branch
        %296 = sbr.rel (%p294) target = $region44
      $region43: #{squeeze_excitation.1} parent=39 // pred_region
        %p297 = scmp.lt.s32.totalorder %s15, 1
        %s298 = scalar_select %p297, %s15, 1
        %s299 = smul.addr %s298, 2
        %s300 = smul.addr %s299, 4
        %s301 = scalar_lea.vmem %s3, %s300
      $region44: #{squeeze_excitation.1} parent=39 // pred_fallthru
        _
    $region40: #{squeeze_excitation.1} parent=5 // pred_fallthru
      _
  $region6: #{squeeze_excitation.1} parent=0 // loop_footer
    %s13 = sadd.s32 1, %s9
  $region7: #{squeeze_excitation.1} parent=0 // loop_footer_branch
    %8 = sbr.rel target = $region3
  $region8: #{squeeze_excitation.1} parent=0 // loop_exit
    _

</llo_original>
